<compile_context>
chip_gen: v7x
topology: tpu7x:2x2x1
jax: 0.10.0
libtpu: 0.0.40
codegen_flags: <defaults>
</compile_context>

<pallas_src>
import functools
import math

import jax
import jax.numpy as jnp
from jax import lax
from jax.experimental import pallas as pl
from jax.experimental.pallas import tpu as pltpu


# ----------------------------------------------------------------------------
# Small helpers
# ----------------------------------------------------------------------------
def _round_up(x, m):
    return (x + m - 1) // m * m


def _largest_aligned_divisor(total, target, align=8):
    """Largest divisor of `total` that is <= target and a multiple of `align`.
    Falls back to `total` (a full-extent block is always legal)."""
    if total <= target:
        return total
    best = None
    d = 1
    while d * d <= total:
        if total % d == 0:
            for t in (d, total // d):
                if t <= target and t % align == 0 and (best is None or t > best):
                    best = t
        d += 1
    return best if best is not None else total


@functools.lru_cache(maxsize=None)
def _vmem_limit():
    """Generation-aware scoped-VMEM limit (~3/4 of per-core capacity)."""
    try:
        cap = int(pltpu.get_tpu_info().vmem_capacity_bytes)
    except Exception:
        cap = 64 * 1024 * 1024        # conservative fallback (fits v7x too)
    return max(32 * 1024 * 1024, min(cap * 3 // 4, 100 * 1024 * 1024))


def _probe_copy_kernel(x_ref, o_ref):
    o_ref[...] = x_ref[...]


@functools.lru_cache(maxsize=None)
def _single_buffer_supported():
    """Probe (once, eagerly) whether pipeline_mode=pl.Buffered(1) is accepted."""
    try:
        fn = pl.pallas_call(
            _probe_copy_kernel,
            grid=(1,),
            in_specs=[pl.BlockSpec((8, 128), lambda i: (0, 0),
                                   pipeline_mode=pl.Buffered(buffer_count=1))],
            out_specs=pl.BlockSpec((8, 128), lambda i: (0, 0)),
            out_shape=jax.ShapeDtypeStruct((8, 128), jnp.float32),
        )
        jax.block_until_ready(fn(jnp.zeros((8, 128), jnp.float32)))
        return True
    except Exception:
        return False


def _const_spec(block_shape, index_map):
    """BlockSpec for grid-constant operands (weights/bias): single-buffered when
    supported so VMEM is not wasted double-buffering constant blocks."""
    if _single_buffer_supported():
        return pl.BlockSpec(block_shape, index_map,
                            pipeline_mode=pl.Buffered(buffer_count=1))
    return pl.BlockSpec(block_shape, index_map)


# ----------------------------------------------------------------------------
# Pallas kernels
# ----------------------------------------------------------------------------
@functools.lru_cache(maxsize=None)
def _make_conv_kernel(n_taps, shift, tm, activation):
    """3x3 'same' conv tile: n_taps accumulating MXU dots over aligned, in-VMEM
    row-shifted windows of the (resident) flattened input."""
    def kernel(x_ref, w_ref, b_ref, o_ref):
        # x_ref: (rows_in, K) bf16 resident per batch element.
        # w_ref: (n_taps, K, Cout) bf16.  b_ref: (1, Cout) f32.  o_ref: (TM, Cout).
        i = pl.program_id(1)
        acc = jnp.zeros(o_ref.shape, jnp.float32)
        for t in range(n_taps):
            start = pl.multiple_of(i * tm + t * shift, 8)   # sublane-aligned slice
            tap = x_ref[pl.ds(start, tm), :]
            acc = acc + jnp.dot(tap, w_ref[t],
                                preferred_element_type=jnp.float32)
        acc = acc + b_ref[...]
        if activation == "relu":
            acc = jnp.maximum(acc, 0.0)
        o_ref[...] = acc.astype(o_ref.dtype)
    return kernel


def _ema_relu_kernel(a_ref, new_ref, prev_ref, cur_ref, act_ref):
    # a_ref: (1,) f32 in SMEM holding sigmoid(alpha) (1.0 for the first frame).
    a = a_ref[0]
    cur = a * new_ref[...] + (1.0 - a) * prev_ref[...]      # f32 state (no drift)
    cur_ref[...] = cur
    act_ref[...] = jnp.maximum(cur, 0.0).astype(act_ref.dtype)


def _final_kernel(y_ref, w_ref, b_ref, o_ref):
    # 1x1 conv with Cout=1 as a VPU weighted sum (lane axis = image width)
    # + sigmoid in f32 (v5e has no bf16 VPU/EUP).
    y = y_ref[...].astype(jnp.float32)                      # (TR, W, C)
    s = jnp.sum(y * w_ref[...], axis=-1) + b_ref[0]         # -> (TR, W)
    o_ref[...] = jax.nn.sigmoid(s)


# ----------------------------------------------------------------------------
# Pallas wrappers
# ----------------------------------------------------------------------------
def conv3x3(x, wk, b2, activation="relu", out_dtype=jnp.bfloat16):
    """Stride-1 'same' 3x3 conv.

    x  : (N, H, W, Cin) activations.
    wk : (n_taps, K, Cout) bf16 weights; n_taps==3 -> width-only im2col
         (K = 3*Cin), n_taps==1 -> full im2col (K = 9*Cin, tiny-Cin first layer).
    b2 : (1, Cout) f32 bias.
    """
    N, H, W, Cin = x.shape
    n_taps, K, Cout = wk.shape
    Wa = _round_up(W, 8)                                    # aligned padded width
    xb = x.astype(jnp.bfloat16)
    xpad = jnp.pad(xb, ((0, 0), (1, 1), (1, 1), (0, 0)))    # (N, H+2, W+2, Cin)
    if n_taps == 1:                                         # full im2col, K = 9*Cin
        cols = [xpad[:, dy:dy + H, dx:dx + W, :]
                for dy in range(3) for dx in range(3)]
        Hc, shift = H, 0
    else:                                                   # width im2col, K = 3*Cin
        cols = [xpad[:, :, dx:dx + W, :] for dx in range(3)]
        Hc, shift = H + 2, Wa
    xcat = jnp.concatenate(cols, axis=-1)
    if Wa != W:
        xcat = jnp.pad(xcat, ((0, 0), (0, 0), (0, Wa - W), (0, 0)))
    x2 = xcat.reshape(N, Hc * Wa, K)

    M = H * Wa                                              # output rows / image
    TM = _largest_aligned_divisor(
        M, max(256, min(2048, (1 << 18) // max(Cout, 64))))
    grid = (N, M // TM)

    flops = 2 * N * M * n_taps * K * Cout
    bytes_accessed = int(x2.size * 2 + wk.size * 2 + b2.size * 4
                         + N * M * Cout * jnp.dtype(out_dtype).itemsize)

    out = pl.pallas_call(
        _make_conv_kernel(n_taps, shift, TM, activation),
        grid=grid,
        in_specs=[
            # Per-image flattened input, resident across the row-tile axis.
            pl.BlockSpec((None, Hc * Wa, K), lambda n, i: (n, 0, 0)),
            # Grid-constant weights / bias: single-buffered when supported.
            _const_spec((n_taps, K, Cout), lambda n, i: (0, 0, 0)),
            _const_spec((1, Cout), lambda n, i: (0, 0)),
        ],
        out_specs=pl.BlockSpec((None, TM, Cout), lambda n, i: (n, i, 0)),
        out_shape=jax.ShapeDtypeStruct((N, M, Cout), out_dtype),
        compiler_params=pltpu.CompilerParams(
            dimension_semantics=("parallel", "parallel"),
            vmem_limit_bytes=_vmem_limit()),
        cost_estimate=pl.CostEstimate(flops=flops, transcendentals=0,
                                      bytes_accessed=bytes_accessed),
    )(x2, wk, b2)

    out = out.reshape(N, H, Wa, Cout)
    if Wa != W:
        out = out[:, :, :W, :]                              # drop alignment columns
    return out


def ema_relu(a_sig, new, prev):
    """Fused: current = a*new + (1-a)*prev (f32 state) and relu(current) (bf16)."""
    shp = new.shape
    C = shp[-1]
    n2 = new.reshape(-1, C)
    p2 = prev.reshape(-1, C)
    R = n2.shape[0]
    TR = _largest_aligned_divisor(R, 512)
    cur, act = pl.pallas_call(
        _ema_relu_kernel,
        grid=(R // TR,),
        in_specs=[pl.BlockSpec(memory_space=pltpu.MemorySpace.SMEM),
                  pl.BlockSpec((TR, C), lambda i: (i, 0)),
                  pl.BlockSpec((TR, C), lambda i: (i, 0))],
        out_specs=(pl.BlockSpec((TR, C), lambda i: (i, 0)),
                   pl.BlockSpec((TR, C), lambda i: (i, 0))),
        out_shape=(jax.ShapeDtypeStruct((R, C), jnp.float32),
                   jax.ShapeDtypeStruct((R, C), jnp.bfloat16)),
        compiler_params=pltpu.CompilerParams(
            dimension_semantics=("parallel",),
            vmem_limit_bytes=_vmem_limit()),
    )(a_sig, n2, p2)
    return cur.reshape(shp), act.reshape(shp)


def final_conv_sigmoid(y, w3, b1):
    """1x1 conv (C->1) + Sigmoid. y: (N,H,W,C); w3: (1,1,C) f32; b1: (1,) f32."""
    N, H, W, C = y.shape
    y3 = y.astype(jnp.bfloat16).reshape(N * H, W, C)
    R = N * H
    TR = _largest_aligned_divisor(R, max(8, (1 << 21) // (W * C * 2)))
    out = pl.pallas_call(
        _final_kernel,
        grid=(R // TR,),
        in_specs=[pl.BlockSpec((TR, W, C), lambda i: (i, 0, 0)),
                  pl.BlockSpec((1, 1, C), lambda i: (0, 0, 0)),
                  pl.BlockSpec(memory_space=pltpu.MemorySpace.SMEM)],
        out_specs=pl.BlockSpec((TR, W), lambda i: (i, 0)),
        out_shape=jax.ShapeDtypeStruct((R, W), jnp.float32),
        compiler_params=pltpu.CompilerParams(
            dimension_semantics=("parallel",),
            vmem_limit_bytes=_vmem_limit()),
    )(y3, w3, b1)
    return out.reshape(N, H, W)


def maxpool2x2(x):
    N, H, W, C = x.shape
    return x.reshape(N, H // 2, 2, W // 2, 2, C).max(axis=(2, 4))


def upsample2x_nearest(x):
    return jnp.repeat(jnp.repeat(x, 2, axis=1), 2, axis=2)


# ----------------------------------------------------------------------------
# Model definition (SalEMA: VGG16 features[:30] encoder + SalGAN decoder + EMA)
# ----------------------------------------------------------------------------
ENC_LAYOUT = ("C", "C", "P", "C", "C", "P", "C", "C", "C", "P",
              "C", "C", "C", "P", "C", "C", "C")
ENC_CH = ((3, 64), (64, 64), (64, 128), (128, 128), (128, 256), (256, 256),
          (256, 256), (256, 512), (512, 512), (512, 512), (512, 512),
          (512, 512), (512, 512))
# decoder after the EMA conv (salgan[30]) + ReLU, before the final 1x1 conv.
DEC_LAYOUT = ("C", "C", "U", "C", "C", "C", "U", "C", "C", "C", "U",
              "C", "C", "U", "C", "C")
DEC_CH = ((512, 512), (512, 512), (512, 512), (512, 512), (512, 512),
          (512, 256), (256, 256), (256, 256), (256, 128), (128, 128),
          (128, 64), (64, 64))


def _init_conv(key, kh, kw, cin, cout):
    wkey, bkey = jax.random.split(key)
    bound = 1.0 / math.sqrt(kh * kw * cin)   # PyTorch Conv2d default init
    w = jax.random.uniform(wkey, (kh, kw, cin, cout), jnp.float32, -bound, bound)
    b = jax.random.uniform(bkey, (cout,), jnp.float32, -bound, bound)
    return w, b


def init_params(key):
    n_enc, n_dec = len(ENC_CH), len(DEC_CH)
    keys = jax.random.split(key, n_enc + n_dec + 2)
    enc = [_init_conv(keys[i], 3, 3, *ENC_CH[i]) for i in range(n_enc)]
    ema = _init_conv(keys[n_enc], 3, 3, 512, 512)            # salgan[30]
    dec = [_init_conv(keys[n_enc + 1 + i], 3, 3, *DEC_CH[i]) for i in range(n_dec)]
    final = _init_conv(keys[-1], 1, 1, 64, 1)                # 1x1 conv + Sigmoid
    return {"enc": enc, "ema": ema, "dec": dec, "final": final,
            "alpha": jnp.array([0.1], jnp.float32)}


def prepare_params(params):
    """Retile/cast weights once per forward (outside the T loop): bf16 MXU operands."""
    def prep(wb, full_im2col=False):
        w, b = wb
        kh, kw, cin, cout = w.shape
        taps = 1 if full_im2col else 3
        wk = w.reshape(taps, (9 // taps) * cin, cout).astype(jnp.bfloat16)
        return wk, b.reshape(1, cout).astype(jnp.float32)
    wf, bf = params["final"]
    return {
        "enc": [prep(p, full_im2col=(i == 0)) for i, p in enumerate(params["enc"])],
        "ema": prep(params["ema"]),
        "dec": [prep(p) for p in params["dec"]],
        "final": (wf.reshape(1, 1, wf.shape[2]).astype(jnp.float32),
                  bf.astype(jnp.float32)),
        "a_sig": jax.nn.sigmoid(params["alpha"]).astype(jnp.float32),
    }


def salema_step(pp, x, prev_state):
    """One SalEMA.forward(input_, prev_state). x: (N,H,W,3) NHWC."""
    h = x
    ci = 0
    for tag in ENC_LAYOUT:                              # salgan[:30] (encoder)
        if tag == "P":
            h = maxpool2x2(h)
        else:
            w, b = pp["enc"][ci]; ci += 1
            h = conv3x3(h, w, b, "relu", jnp.bfloat16)
    # residual unused (SalEMA default residual=False); dropout2d -> identity (TODO above).
    w_e, b_e = pp["ema"]
    s = conv3x3(h, w_e, b_e, "none", jnp.float32)       # salgan[30], f32 for EMA state
    if prev_state is None:
        a_sig = jnp.ones((1,), jnp.float32)             # current = s exactly
        prev = jnp.zeros_like(s)
    else:
        a_sig = pp["a_sig"]
        prev = prev_state
    current, y = ema_relu(a_sig, s, prev)               # fused blend + salgan[31] ReLU
    ci = 0
    for tag in DEC_LAYOUT:                              # salgan[32:] decoder
        if tag == "U":
            y = upsample2x_nearest(y)
        else:
            w, b = pp["dec"][ci]; ci += 1
            y = conv3x3(y, w, b, "relu", jnp.bfloat16)
    w_f, b_f = pp["final"]
    sal = final_conv_sigmoid(y, w_f, b_f)               # (N, H, W)
    return current, sal


def salema_forward(params, x):
    """Salema.forward. x: (B, T, C, H, W) (PyTorch layout). Returns (B, H, W)."""
    pp = prepare_params(params)
    T = x.shape[1]
    x0 = jnp.transpose(x[:, 0], (0, 2, 3, 1))           # NCHW -> NHWC
    state, sal = salema_step(pp, x0, None)              # frame 0: no previous state
    if T > 1:
        xs = jnp.moveaxis(x[:, 1:], 1, 0)               # (T-1, B, C, H, W)

        def body(carry, xt):
            st, _ = carry
            st, sal_t = salema_step(pp, jnp.transpose(xt, (0, 2, 3, 1)), st)
            return (st, sal_t), None

        (state, sal), _ = lax.scan(body, (state, sal), xs)
    return sal                                          # final .squeeze(): (B, H, W)


if __name__ == "__main__":
    key = jax.random.PRNGKey(0)
    pkey, xkey, ckey = jax.random.split(key, 3)

    # Self-check both conv paths (full im2col K=9*Cin and width im2col K=3*Cin)
    # against XLA's conv, including a width that is not a multiple of 8.
    for cin, cout, taps in ((3, 64, 1), (8, 16, 3)):
        k1 = jax.random.fold_in(ckey, cin)
        cw, cb = _init_conv(k1, 3, 3, cin, cout)
        cx = jax.random.normal(jax.random.fold_in(k1, 7), (2, 12, 20, cin),
                               jnp.float32)
        wk = cw.reshape(taps, (9 // taps) * cin, cout).astype(jnp.bfloat16)
        got = conv3x3(cx, wk, cb.reshape(1, cout), activation="none",
                      out_dtype=jnp.float32)
        cxq = cx.astype(jnp.bfloat16).astype(jnp.float32)
        cwq = cw.astype(jnp.bfloat16).astype(jnp.float32)
        ref = lax.conv_general_dilated(
            cxq, cwq, (1, 1), "SAME",
            dimension_numbers=("NHWC", "HWIO", "NHWC")) + cb
        assert jnp.allclose(got, ref, atol=3e-2, rtol=3e-2), \
            float(jnp.max(jnp.abs(got - ref)))

    params = init_params(pkey)
    # batch=2, seq=3, RGB, 32x32 (divisible by 16 for the four maxpools).
    x = jax.random.normal(xkey, (2, 3, 3, 32, 32), jnp.float32)
    fwd = jax.jit(salema_forward)
    out = fwd(params, x)
    jax.block_until_ready(out)
    assert out.shape == (2, 32, 32), out.shape
    assert bool(jnp.all(jnp.isfinite(out)))
    assert bool(jnp.all((out >= 0.0) & (out <= 1.0)))   # final Sigmoid
    print("KERNEL_OK")
</pallas_src>

<mosaic_0001>
module attributes {stable_mosaic.version = 11 : i64} {
  func.func @_probe_copy_kernel(%arg0: i32, %arg1: memref<8x128xf32, #tpu.memory_space<vmem>>, %arg2: memref<8x128xf32, #tpu.memory_space<vmem>>) attributes {dimension_semantics = [#tpu.dimension_semantics<arbitrary>], iteration_bounds = array<i64: 1>, scalar_prefetch = 0 : i64, scratch_operands = 0 : i64, tpu.core_type = #tpu.core_type<tc>, window_params = [{pipeline_mode = #tpu.pipeline_mode<synchronous>, transform_indices = @transform_0, window_bounds = array<i64: 8, 128>}, {pipeline_mode = #tpu.pipeline_mode<synchronous>, transform_indices = @transform_1, window_bounds = array<i64: 8, 128>}]} {
    %c0 = arith.constant 0 : index
    %c0_0 = arith.constant 0 : index
    %0 = vector.load %arg1[%c0, %c0_0] : memref<8x128xf32, #tpu.memory_space<vmem>>, vector<8x128xf32>
    %c0_1 = arith.constant 0 : index
    %c0_2 = arith.constant 0 : index
    %1 = vector.load %arg2[%c0_1, %c0_2] : memref<8x128xf32, #tpu.memory_space<vmem>>, vector<8x128xf32>
    tpu.vector_store %arg2[%c0_1, %c0_2], %0 {strides = array<i32>} : memref<8x128xf32, #tpu.memory_space<vmem>>, vector<8x128xf32>,
    return
  }
  func.func @transform_0(%arg0: i32) -> (i32, i32) {
    %c0_i32 = arith.constant 0 : i32
    %c0_i32_0 = arith.constant 0 : i32
    %c0_i32_1 = arith.constant 0 : i32
    return %c0_i32, %c0_i32_0 : i32, i32
  }
  func.func @transform_1(%arg0: i32) -> (i32, i32) {
    %c0_i32 = arith.constant 0 : i32
    %c0_i32_0 = arith.constant 0 : i32
    %c0_i32_1 = arith.constant 0 : i32
    return %c0_i32, %c0_i32_0 : i32, i32
  }
}

module attributes {stable_mosaic.version = 11 : i64} {
  func.func @kernel(%arg0: i32, %arg1: i32, %arg2: memref<1x288x27xbf16, #tpu.memory_space<vmem>>, %arg3: memref<1x27x64xbf16, #tpu.memory_space<vmem>>, %arg4: memref<1x64xf32, #tpu.memory_space<vmem>>, %arg5: memref<1x288x64xf32, #tpu.memory_space<vmem>>) attributes {dimension_semantics = [#tpu.dimension_semantics<parallel>, #tpu.dimension_semantics<parallel>], iteration_bounds = array<i64: 2, 1>, scalar_prefetch = 0 : i64, scratch_operands = 0 : i64, tpu.core_type = #tpu.core_type<tc>, window_params = [{transform_indices = @transform_0, window_bounds = array<i64: 1, 288, 27>}, {pipeline_mode = #tpu.pipeline_mode<synchronous>, transform_indices = @transform_1, window_bounds = array<i64: 1, 27, 64>}, {pipeline_mode = #tpu.pipeline_mode<synchronous>, transform_indices = @transform_2, window_bounds = array<i64: 1, 64>}, {transform_indices = @transform_3, window_bounds = array<i64: 1, 288, 64>}]} {
    %cst = arith.constant 0.000000e+00 : f32
    %0 = vector.broadcast %cst : f32 to vector<288x64xf32>
    %c288_i32 = arith.constant 288 : i32
    %1 = arith.muli %arg1, %c288_i32 : i32
    %c0_i32 = arith.constant 0 : i32
    %2 = arith.addi %1, %c0_i32 : i32
    %3 = tpu.assume_multiple %2, 8 : i32
    %c0 = arith.constant 0 : index
    %4 = arith.index_cast %3 : i32 to index
    %c0_0 = arith.constant 0 : index
    %5 = vector.load %arg2[%c0, %4, %c0_0] : memref<1x288x27xbf16, #tpu.memory_space<vmem>>, vector<1x288x27xbf16>
    %6 = vector.shape_cast %5 : vector<1x288x27xbf16> to vector<288x27xbf16>
    %c0_1 = arith.constant 0 : index
    %c0_2 = arith.constant 0 : index
    %c0_3 = arith.constant 0 : index
    %7 = vector.load %arg3[%c0_1, %c0_2, %c0_3] : memref<1x27x64xbf16, #tpu.memory_space<vmem>>, vector<1x27x64xbf16>
    %8 = vector.shape_cast %7 : vector<1x27x64xbf16> to vector<27x64xbf16>
    %cst_4 = arith.constant dense<0.000000e+00> : vector<288x64xf32>
    %9 = tpu.matmul %6, %8, %cst_4 {dimension_numbers = #tpu.dot_dimension_numbers<[1], [0], [0], [1], [0, 0, 1, 1], [], []>} : vector<288x27xbf16>, vector<27x64xbf16>, vector<288x64xf32> -> vector<288x64xf32>
    %10 = arith.addf %0, %9 : vector<288x64xf32>
    %c0_5 = arith.constant 0 : index
    %c0_6 = arith.constant 0 : index
    %11 = vector.load %arg4[%c0_5, %c0_6] : memref<1x64xf32, #tpu.memory_space<vmem>>, vector<1x64xf32>
    %12 = vector.broadcast %11 : vector<1x64xf32> to vector<288x64xf32>
    %13 = arith.addf %10, %12 : vector<288x64xf32>
    %c0_7 = arith.constant 0 : index
    %c0_8 = arith.constant 0 : index
    %c0_9 = arith.constant 0 : index
    %14 = vector.load %arg5[%c0_7, %c0_8, %c0_9] : memref<1x288x64xf32, #tpu.memory_space<vmem>>, vector<1x288x64xf32>
    %15 = vector.shape_cast %14 : vector<1x288x64xf32> to vector<288x64xf32>
    %16 = vector.shape_cast %13 : vector<288x64xf32> to vector<1x288x64xf32>
    tpu.vector_store %arg5[%c0_7, %c0_8, %c0_9], %16 {strides = array<i32>} : memref<1x288x64xf32, #tpu.memory_space<vmem>>, vector<1x288x64xf32>,
    return
  }
  func.func @transform_0(%arg0: i32, %arg1: i32) -> (i32, i32, i32) {
    %c0_i32 = arith.constant 0 : i32
    %c0_i32_0 = arith.constant 0 : i32
    %c0_i32_1 = arith.constant 0 : i32
    return %arg0, %c0_i32, %c0_i32_0 : i32, i32, i32
  }
  func.func @transform_1(%arg0: i32, %arg1: i32) -> (i32, i32, i32) {
    %c0_i32 = arith.constant 0 : i32
    %c0_i32_0 = arith.constant 0 : i32
    %c0_i32_1 = arith.constant 0 : i32
    %c0_i32_2 = arith.constant 0 : i32
    return %c0_i32, %c0_i32_0, %c0_i32_1 : i32, i32, i32
  }
  func.func @transform_2(%arg0: i32, %arg1: i32) -> (i32, i32) {
    %c0_i32 = arith.constant 0 : i32
    %c0_i32_0 = arith.constant 0 : i32
    %c0_i32_1 = arith.constant 0 : i32
    return %c0_i32, %c0_i32_0 : i32, i32
  }
  func.func @transform_3(%arg0: i32, %arg1: i32) -> (i32, i32, i32) {
    %c0_i32 = arith.constant 0 : i32
    %c0_i32_0 = arith.constant 0 : i32
    return %arg0, %arg1, %c0_i32 : i32, i32, i32
  }
}

</mosaic_0001>

<llo_original>
// kernel: tpu_custom_call.1
$region0: #{tpu_custom_call.1}
  #allocation0 [shape = 'u32[]', space=smem, size = 0x4, offset = 0x4, fixed_abs, tag = 'smem constant byte address 0x4 - core index']
  #allocation1 [shape = 'u32[144,128]{1,0:T(1,128)}', space=vmem, size = 0x12000, scoped, tag = 'internal scratch']
  %s0 = inlined_call_operand.hbm [shape: f32[8,128], index: 0, kind: input, shape index: {}]
  %s1 = inlined_call_operand.hbm [shape: f32[8,128], index: 1, kind: output, shape index: {}]
  %s2 = sld [smem:[#allocation0]]
  $region18: #{tpu_custom_call.1} parent=0
    _
  %s4 = ssub.s32 1, %s2
  %s5 = scalar_select 0, %s4, %s2
  $region1: #{tpu_custom_call.1} parent=0
    #allocation2 [shape = 'u8[4096]{0}', space=vmem, size = 0x1000, scoped, tag = 'input window, operand 0, single buffered']
    #allocation3 [shape = 's32[1]{0}', space=sflag, size = 0x4, scoped, tag = 'scoped memory for tpu_custom_call.1']
    #allocation4 [shape = 's32[1]{0}', space=sflag, size = 0x4, scoped, tag = 'scoped memory for tpu_custom_call.1']
    #allocation5 [shape = 'u8[4096]{0}', space=vmem, size = 0x1000, scoped, tag = 'output window, operand 0, single buffered']
    %6 = vsyncpa [#allocation3], 0
    %7 = vsyncpa [#allocation4], 0
    // Predicated region
    $region2: #{tpu_custom_call.1} parent=1 // pred_check
      _
    $region3: #{tpu_custom_call.1} parent=1 // pred_check_branch
      %9 = sbr.rel (0) target = $region5
    $region4: #{tpu_custom_call.1} parent=1 // pred_region
      %s11 = ssub.s32 128, 128
      %12 = vsyncadd [#allocation3], %s11
      %s14 = sshll.u32 [#allocation2], 4
      %s15 = int_to_ptr.vmem [resolvable:$true] %s14
      %17 = dma.hbm_to_vmem [thread:$0]  %s0, 128, %s15, [#allocation3]
    $region5: #{tpu_custom_call.1} parent=1 // pred_fallthru
      _
    // Predicated region
    $region6: #{tpu_custom_call.1} parent=1 // pred_check
      _
    $region7: #{tpu_custom_call.1} parent=1 // pred_check_branch
      %19 = sbr.rel (0) target = $region9
    $region8: #{tpu_custom_call.1} parent=1 // pred_region
      %20 = dma.done [#allocation3], 128
    $region9: #{tpu_custom_call.1} parent=1 // pred_fallthru
      _
    %v21 = vld [vmem:[#allocation2] sm:$0xff]
    %22 = vst [vmem:[#allocation5] sm:$0xff] %v21
    // Predicated region
    $region10: #{tpu_custom_call.1} parent=1 // pred_check
      _
    $region11: #{tpu_custom_call.1} parent=1 // pred_check_branch
      %24 = sbr.rel (0) target = $region13
    $region12: #{tpu_custom_call.1} parent=1 // pred_region
      %s26 = ssub.s32 128, 128
      %27 = vsyncadd [#allocation4], %s26
      %s29 = sshll.u32 [#allocation5], 4
      %s30 = int_to_ptr.vmem [resolvable:$true] %s29
      %32 = dma.vmem_to_hbm [thread:$0]  %s30, 128, %s1, [#allocation4]
    $region13: #{tpu_custom_call.1} parent=1 // pred_fallthru
      _
    // Predicated region
    $region14: #{tpu_custom_call.1} parent=1 // pred_check
      _
    $region15: #{tpu_custom_call.1} parent=1 // pred_check_branch
      %34 = sbr.rel (0) target = $region17
    $region16: #{tpu_custom_call.1} parent=1 // pred_region
      %35 = dma.done [#allocation4], 128
    $region17: #{tpu_custom_call.1} parent=1 // pred_fallthru
      _
    %36 = vsyncpa [#allocation3], 1
    %37 = vsyncpa [#allocation4], 1

// kernel: tpu_custom_call.1
$region0: #{tpu_custom_call.1}
  #allocation0 [shape = 'u32[]', space=smem, size = 0x4, offset = 0x4, fixed_abs, tag = 'smem constant byte address 0x4 - core index']
  #allocation1 [shape = 'u32[144,128]{1,0:T(1,128)}', space=vmem, size = 0x12000, scoped, tag = 'internal scratch']
  %s0 = inlined_call_operand.vmem [shape: bf16[2,288,27], index: 0, kind: input, shape index: {}]
  %s1 = inlined_call_operand.vmem [shape: bf16[1,27,64], index: 1, kind: input, shape index: {}]
  %s2 = inlined_call_operand.vmem [shape: f32[1,64], index: 2, kind: input, shape index: {}]
  %s3 = inlined_call_operand.vmem [shape: f32[2,288,64], index: 3, kind: output, shape index: {}]
  %s4 = sld [smem:[#allocation0]]
  $region45: #{tpu_custom_call.1} parent=0
    _
  %s6 = ssub.s32 1, %s4
  %s7 = scalar_select 0, %s6, %s4
  loop: start=0, step=1, limit=4
  $region2: #{tpu_custom_call.1} parent=0 // loop_pre_header
    _
  $region3: #{tpu_custom_call.1} parent=0 // loop_header
    %s9 = sphi 0, %s13
    %p10 = scmp.ge.s32.totalorder %s9, 4
    %s16 = sphi 0, %s28
    %s17 = sphi 0, %s24
    %s18 = sphi 0, %s16
    %s19 = sphi 0, %s17
    %s20 = sphi 0, %s18
    %s21 = sphi 0, %s19
    %s31 = sphi 0, %s33
    %s34 = sphi 0, %s31
    %s35 = sphi 0, %s34
    %s51 = sphi 0, %s35
    %s55 = sphi 0, %s55
    %s57 = sphi 0, %s55
    %s58 = sphi 0, %s57
    %s72 = sphi 0, %s58
    %s76 = sphi 0, %s76
    %s78 = sphi 0, %s76
    %s79 = sphi 0, %s78
    %s93 = sphi 0, %s79
    %s101 = sphi 0, %s103
    %s104 = sphi 0, %s101
    %s105 = sphi 0, %s104
    %s121 = sphi 0, %s105
  $region4: #{tpu_custom_call.1} parent=0 // loop_header_branch
    %12 = sbr.rel (%p10) target = $region8
  $region5: #{tpu_custom_call.1} parent=0 // loop_body
    %s14 = ssub.s32 %s9, 1
    %s15 = ssub.s32 %s9, 2
    %s22 = sadd.s32 1, %s17
    %p23 = scmp.ge.s32.totalorder %s22, 1
    %s24 = scalar_select %p23, 0, %s22
    %s25 = sadd.s32 1, %s16
    %s26 = scalar_select %p23, %s25, %s16
    %p27 = scmp.ge.s32.totalorder %s26, 2
    %s28 = scalar_select %p27, 0, %s26
    %s29 = ssub.s32 %s16, %s28
    %p30 = scmp.eq.s32.totalorder %s29, 0
    %s32 = sadd.s32 %s31, 1
    %s33 = scalar_select %p30, %s31, %s32
    %p36 = pneg %p30
    %p37 = scmp.eq.s32.totalorder %s9, 1
    %p38 = por %p36, %p37
    %p39 = scmp.ne.s32.totalorder %s31, %s34
    %p40 = scmp.eq.s32.totalorder %s9, 0
    %p41 = por %p39, %p40
    %p42 = scmp.ne.s32.totalorder %s31, %s34
    %p43 = scmp.eq.s32.totalorder %s14, 1
    %p44 = por %p42, %p43
    %p45 = scmp.ne.s32.totalorder %s34, %s35
    %p46 = scmp.eq.s32.totalorder %s14, 0
    %p47 = por %p45, %p46
    %p48 = scmp.ne.s32.totalorder %s34, %s35
    %p49 = scmp.eq.s32.totalorder %s15, 1
    %p50 = por %p48, %p49
    %p52 = scmp.ne.s32.totalorder %s35, %s51
    %p53 = scmp.eq.s32.totalorder %s15, 0
    %p54 = por %p52, %p53
    %s56 = sadd.s32 %s55, 1
    %p59 = scmp.eq.s32.totalorder %s9, 1
    %p60 = scmp.ne.s32.totalorder %s55, %s57
    %p61 = scmp.eq.s32.totalorder %s9, 0
    %p62 = por %p60, %p61
    %p63 = scmp.ne.s32.totalorder %s55, %s57
    %p64 = scmp.eq.s32.totalorder %s14, 1
    %p65 = por %p63, %p64
    %p66 = scmp.ne.s32.totalorder %s57, %s58
    %p67 = scmp.eq.s32.totalorder %s14, 0
    %p68 = por %p66, %p67
    %p69 = scmp.ne.s32.totalorder %s57, %s58
    %p70 = scmp.eq.s32.totalorder %s15, 1
    %p71 = por %p69, %p70
    %p73 = scmp.ne.s32.totalorder %s58, %s72
    %p74 = scmp.eq.s32.totalorder %s15, 0
    %p75 = por %p73, %p74
    %s77 = sadd.s32 %s76, 1
    %p80 = scmp.eq.s32.totalorder %s9, 1
    %p81 = scmp.ne.s32.totalorder %s76, %s78
    %p82 = scmp.eq.s32.totalorder %s9, 0
    %p83 = por %p81, %p82
    %p84 = scmp.ne.s32.totalorder %s76, %s78
    %p85 = scmp.eq.s32.totalorder %s14, 1
    %p86 = por %p84, %p85
    %p87 = scmp.ne.s32.totalorder %s78, %s79
    %p88 = scmp.eq.s32.totalorder %s14, 0
    %p89 = por %p87, %p88
    %p90 = scmp.ne.s32.totalorder %s78, %s79
    %p91 = scmp.eq.s32.totalorder %s15, 1
    %p92 = por %p90, %p91
    %p94 = scmp.ne.s32.totalorder %s79, %s93
    %p95 = scmp.eq.s32.totalorder %s15, 0
    %p96 = por %p94, %p95
    %s97 = ssub.s32 %s16, %s28
    %s98 = ssub.s32 %s17, %s24
    %s99 = sor.u32 %s97, %s98
    %p100 = scmp.eq.s32.totalorder %s99, 0
    %s102 = sadd.s32 %s101, 1
    %s103 = scalar_select %p100, %s101, %s102
    %p106 = pneg %p100
    %p107 = scmp.eq.s32.totalorder %s9, 1
    %p108 = por %p106, %p107
    %p109 = scmp.ne.s32.totalorder %s101, %s104
    %p110 = scmp.eq.s32.totalorder %s9, 0
    %p111 = por %p109, %p110
    %p112 = scmp.ne.s32.totalorder %s101, %s104
    %p113 = scmp.eq.s32.totalorder %s14, 1
    %p114 = por %p112, %p113
    %p115 = scmp.ne.s32.totalorder %s104, %s105
    %p116 = scmp.eq.s32.totalorder %s14, 0
    %p117 = por %p115, %p116
    %p118 = scmp.ne.s32.totalorder %s104, %s105
    %p119 = scmp.eq.s32.totalorder %s15, 1
    %p120 = por %p118, %p119
    %p122 = scmp.ne.s32.totalorder %s105, %s121
    %p123 = scmp.eq.s32.totalorder %s15, 0
    %p124 = por %p122, %p123
    %p125 = scmp.le.s32.totalorder 1, %s9
    %p126 = scmp.lt.s32.totalorder %s9, 3
    %p127 = pnand %p125, %p126
    %p128 = pneg %p127
    // Predicated region
    $region9: #{tpu_custom_call.1} parent=5 // pred_check
      _
    $region10: #{tpu_custom_call.1} parent=5 // pred_check_branch
      %130 = sbr.rel (%p127) target = $region12
    $region11: #{tpu_custom_call.1} parent=5 // pred_region
      %s131 = ssub.s32 %s9, 1
      // Predicated region
      $region13: #{tpu_custom_call.1} parent=11 // pred_check
        %p132 = pneg %p68
      $region14: #{tpu_custom_call.1} parent=11 // pred_check_branch
        %134 = sbr.rel (%p132) target = $region16
      $region15: #{tpu_custom_call.1} parent=11 // pred_region
        _
      $region16: #{tpu_custom_call.1} parent=11 // pred_fallthru
        _
      // Predicated region
      $region17: #{tpu_custom_call.1} parent=11 // pred_check
        %p135 = pneg %p89
      $region18: #{tpu_custom_call.1} parent=11 // pred_check_branch
        %137 = sbr.rel (%p135) target = $region20
      $region19: #{tpu_custom_call.1} parent=11 // pred_region
        _
      $region20: #{tpu_custom_call.1} parent=11 // pred_fallthru
        _
    $region12: #{tpu_custom_call.1} parent=5 // pred_fallthru
      _
    %p138 = scmp.lt.s32.totalorder %s9, 2
    // Predicated region
    $region21: #{tpu_custom_call.1} parent=5 // pred_check
      %p139 = pneg %p138
    $region22: #{tpu_custom_call.1} parent=5 // pred_check_branch
      %141 = sbr.rel (%p139) target = $region24
    $region23: #{tpu_custom_call.1} parent=5 // pred_region
      // Predicated region
      $region25: #{tpu_custom_call.1} parent=23 // pred_check
        %p142 = pneg %p41
      $region26: #{tpu_custom_call.1} parent=23 // pred_check_branch
        %144 = sbr.rel (%p142) target = $region28
      $region27: #{tpu_custom_call.1} parent=23 // pred_region
        %p145 = scmp.lt.s32.totalorder %s16, 1
        %s146 = scalar_select %p145, %s16, 1
        %s147 = smul.addr %s146, 36
        %s148 = smul.addr %s147, 4
        %s149 = scalar_lea.vmem %s0, %s148
      $region28: #{tpu_custom_call.1} parent=23 // pred_fallthru
        _
    $region24: #{tpu_custom_call.1} parent=5 // pred_fallthru
      _
    %p150 = scmp.le.s32.totalorder 1, %s9
    %p151 = scmp.lt.s32.totalorder %s9, 3
    %p152 = pnand %p150, %p151
    %p153 = pneg %p152
    // Predicated region
    $region29: #{tpu_custom_call.1} parent=5 // pred_check
      _
    $region30: #{tpu_custom_call.1} parent=5 // pred_check_branch
      %155 = sbr.rel (%p152) target = $region32
    $region31: #{tpu_custom_call.1} parent=5 // pred_region
      %s156 = ssub.s32 %s9, 1
      %p157 = scmp.lt.s32.totalorder %s18, 1
      %s158 = scalar_select %p157, %s18, 1
      %s159 = smul.addr %s158, 36
      %s160 = smul.addr %s159, 4
      %s161 = scalar_lea.vmem %s0, %s160
      %p162 = pneg %p47
      %p163 = pneg %p44
      %p164 = pneg %p68
      %p165 = pneg %p65
      %p166 = pneg %p89
      %p167 = pneg %p86
      %p168 = pneg %p117
      %p169 = pneg %p114
      %s170 = smul.u32 36, %s19
      %p171 = scmp.lt.s32.totalorder %s18, 1
      %s172 = scalar_select %p171, %s18, 1
      %p173 = scmp.lt.s32.totalorder %s170, 35
      %s174 = scalar_select %p173, %s170, 35
      %s175 = smul.addr %s172, 36
      %s176 = sadd.s32 %s174, %s175
      %s177 = smul.addr %s176, 8
      %s178 = scalar_lea.vmem %s3, %s177
      %p179 = scmp.lt.s32.totalorder %s18, 1
      %s180 = scalar_select %p179, %s18, 1
      %s181 = smul.addr %s180, 36
      %s182 = smul.addr %s181, 4
      %s183 = scalar_lea.vmem %s0, %s182
      %s184 = smul.u32 36, %s19
      %p185 = scmp.lt.s32.totalorder %s18, 1
      %s186 = scalar_select %p185, %s18, 1
      %p187 = scmp.lt.s32.totalorder %s184, 35
      %s188 = scalar_select %p187, %s184, 35
      %s189 = smul.addr %s186, 36
      %s190 = sadd.s32 %s188, %s189
      %s191 = smul.addr %s190, 8
      %s192 = scalar_lea.vmem %s3, %s191
      %s193 = smul.u32 36, %s19
      %s195 = smul.u32 %s19, 288
      %s196 = sshra.s32 %s195, 3
      %s197 = sand.u32 %s195, 7
      %s198 = smul.addr %s196, 4
      %s199 = scalar_lea.vmem %s183, %s198
      %v200 = vld [vmem:[%s199] sm:$0xf]
      %v201 = vld [vmem:[%s199 + $0x4] sm:$0xf]
      %v202 = vld [vmem:[%s199 + $0x8] sm:$0xf]
      %v203 = vld [vmem:[%s199 + $0xc] sm:$0xf]
      %v204 = vld [vmem:[%s199 + $0x10] sm:$0xf]
      %v205 = vld [vmem:[%s199 + $0x14] sm:$0xf]
      %v206 = vld [vmem:[%s199 + $0x18] sm:$0xf]
      %v207 = vld [vmem:[%s199 + $0x1c] sm:$0xf]
      %v208 = vld [vmem:[%s199 + $0x20] sm:$0xf]
      %v209 = vld [vmem:[%s199 + $0x24] sm:$0xf]
      %v210 = vld [vmem:[%s199 + $0x28] sm:$0xf]
      %v211 = vld [vmem:[%s199 + $0x2c] sm:$0xf]
      %v212 = vld [vmem:[%s199 + $0x30] sm:$0xf]
      %v213 = vld [vmem:[%s199 + $0x34] sm:$0xf]
      %v214 = vld [vmem:[%s199 + $0x38] sm:$0xf]
      %v215 = vld [vmem:[%s199 + $0x3c] sm:$0xf]
      %v216 = vld [vmem:[%s199 + $0x40] sm:$0xf]
      %v217 = vld [vmem:[%s199 + $0x44] sm:$0xf]
      %v218 = vld [vmem:[%s199 + $0x48] sm:$0xf]
      %v219 = vld [vmem:[%s199 + $0x4c] sm:$0xf]
      %v220 = vld [vmem:[%s199 + $0x50] sm:$0xf]
      %v221 = vld [vmem:[%s199 + $0x54] sm:$0xf]
      %v222 = vld [vmem:[%s199 + $0x58] sm:$0xf]
      %v223 = vld [vmem:[%s199 + $0x5c] sm:$0xf]
      %v224 = vld [vmem:[%s199 + $0x60] sm:$0xf]
      %v225 = vld [vmem:[%s199 + $0x64] sm:$0xf]
      %v226 = vld [vmem:[%s199 + $0x68] sm:$0xf]
      %v227 = vld [vmem:[%s199 + $0x6c] sm:$0xf]
      %v228 = vld [vmem:[%s199 + $0x70] sm:$0xf]
      %v229 = vld [vmem:[%s199 + $0x74] sm:$0xf]
      %v230 = vld [vmem:[%s199 + $0x78] sm:$0xf]
      %v231 = vld [vmem:[%s199 + $0x7c] sm:$0xf]
      %v232 = vld [vmem:[%s199 + $0x80] sm:$0xf]
      %v233 = vld [vmem:[%s199 + $0x84] sm:$0xf]
      %v234 = vld [vmem:[%s199 + $0x88] sm:$0xf]
      %v235 = vld [vmem:[%s199 + $0x8c] sm:$0xf]
      %v236 = vld [vmem:[%s1] sm:$0xf]
      %v237 = vld [vmem:[%s1 + $0x4] sm:$0xf]
      %v238 = vld [vmem:[%s1 + $0x8] sm:$0xf]
      %v239 = vld [vmem:[%s1 + $0xc] sm:$0x3]
      %v240 = vld [vmem:[%s2] sm:$0x1]
      %v242 = vlaneseq
      %v243 = vshrl.u32 %v242, 7
      %v244 = vsub.s32 0, %v243
      %v245 = vrot.slane %v240, %v244
      %v283 = vunpack.c.l.b16 %v200
      %v284 = vunpack.c.l.b16 %v201
      %v285 = vunpack.c.l.b16 %v202
      %v286 = vunpack.c.l.b16 %v203
      %v287 = vunpack.c.l.b16 %v204
      %v288 = vunpack.c.l.b16 %v205
      %v289 = vunpack.c.l.b16 %v206
      %v290 = vunpack.c.l.b16 %v207
      %v291 = vunpack.c.l.b16 %v208
      %v292 = vunpack.c.l.b16 %v209
      %v293 = vunpack.c.l.b16 %v210
      %v294 = vunpack.c.l.b16 %v211
      %v295 = vunpack.c.l.b16 %v212
      %v296 = vunpack.c.l.b16 %v213
      %v297 = vunpack.c.l.b16 %v214
      %v298 = vunpack.c.l.b16 %v215
      %v299 = vunpack.c.l.b16 %v216
      %v300 = vunpack.c.l.b16 %v217
      %v301 = vunpack.c.l.b16 %v218
      %v302 = vunpack.c.l.b16 %v219
      %v303 = vunpack.c.l.b16 %v220
      %v304 = vunpack.c.l.b16 %v221
      %v305 = vunpack.c.l.b16 %v222
      %v306 = vunpack.c.l.b16 %v223
      %v307 = vunpack.c.l.b16 %v224
      %v308 = vunpack.c.l.b16 %v225
      %v309 = vunpack.c.l.b16 %v226
      %v310 = vunpack.c.l.b16 %v227
      %v311 = vunpack.c.l.b16 %v228
      %v312 = vunpack.c.l.b16 %v229
      %v313 = vunpack.c.l.b16 %v230
      %v314 = vunpack.c.l.b16 %v231
      %v315 = vunpack.c.l.b16 %v232
      %v316 = vunpack.c.l.b16 %v233
      %v317 = vunpack.c.l.b16 %v234
      %v318 = vunpack.c.l.b16 %v235
      %v319 = vpack.c.b16 %v284, %v283
      %v320 = vpack.c.b16 %v286, %v285
      %v321 = vpack.c.b16 %v288, %v287
      %v322 = vpack.c.b16 %v290, %v289
      %v323 = vpack.c.b16 %v292, %v291
      %v324 = vpack.c.b16 %v294, %v293
      %v325 = vpack.c.b16 %v296, %v295
      %v326 = vpack.c.b16 %v298, %v297
      %v327 = vpack.c.b16 %v300, %v299
      %v328 = vpack.c.b16 %v302, %v301
      %v329 = vpack.c.b16 %v304, %v303
      %v330 = vpack.c.b16 %v306, %v305
      %v331 = vpack.c.b16 %v308, %v307
      %v332 = vpack.c.b16 %v310, %v309
      %v333 = vpack.c.b16 %v312, %v311
      %v334 = vpack.c.b16 %v314, %v313
      %v335 = vpack.c.b16 %v316, %v315
      %v336 = vpack.c.b16 %v318, %v317
      %v341 = vunpack.c.l.b16 %v236
      %v342 = vunpack.c.l.b16 %v237
      %v343 = vunpack.c.l.b16 %v238
      %v344 = vunpack.c.l.b16 %v239
      %v345 = vpack.c.b16 %v342, %v341
      %v346 = vpack.c.b16 %v344, %v343
      %vm348 = vcmask 220160
      %v350 = vsel %vm348, %v319, 0
      %v353 = vsel %vm348, %v320, 0
      %v356 = vsel %vm348, %v321, 0
      %v359 = vsel %vm348, %v322, 0
      %v362 = vsel %vm348, %v323, 0
      %v365 = vsel %vm348, %v324, 0
      %v368 = vsel %vm348, %v325, 0
      %v371 = vsel %vm348, %v326, 0
      %v374 = vsel %vm348, %v327, 0
      %v377 = vsel %vm348, %v328, 0
      %v380 = vsel %vm348, %v329, 0
      %v383 = vsel %vm348, %v330, 0
      %v386 = vsel %vm348, %v331, 0
      %v389 = vsel %vm348, %v332, 0
      %v392 = vsel %vm348, %v333, 0
      %v395 = vsel %vm348, %v334, 0
      %v398 = vsel %vm348, %v335, 0
      %v401 = vsel %vm348, %v336, 0
      %vm403 = vcmask 1044480
      %vm404 = vcmask 1045504
      %v405 = vsel %vm403, 4294967295, 65535
      %v406 = vsel %vm404, %v405, 0
      %v408 = vand.u32 %v346, %v406
      %410 = vmatprep.subr.bf16.mxu0 0
      %411 = vmatpush1.bf16.msra.mxu0 %v345
      %412 = vmatprep.subr.bf16.mxu0 0
      %413 = vmatpush1.bf16.msra.mxu0 %v408
      %414 = vmatprep.subr.bf16.mxu0 0
      %415 = vmatpush1.bf16.msra.mxu0 0
      %416 = vmatprep.subr.bf16.mxu0 0
      %417 = vmatpush1.bf16.msra.mxu0 0
      %418 = vmatprep.subr.bf16.mxu0 0
      %419 = vmatpush1.bf16.msra.mxu0 0
      %420 = vmatprep.subr.bf16.mxu0 0
      %421 = vmatpush1.bf16.msra.mxu0 0
      %422 = vmatprep.subr.bf16.mxu0 0
      %423 = vmatpush1.bf16.msra.mxu0 0
      %424 = vmatprep.subr.bf16.mxu0 0
      %425 = vmatpush1.bf16.msra.mxu0 0
      %426 = vmatprep.subr.bf16.mxu0 0
      %427 = vmatpush1.bf16.msra.mxu0 0
      %428 = vmatprep.subr.bf16.mxu0 0
      %429 = vmatpush1.bf16.msra.mxu0 0
      %430 = vmatprep.subr.bf16.mxu0 0
      %431 = vmatpush1.bf16.msra.mxu0 0
      %432 = vmatprep.subr.bf16.mxu0 0
      %433 = vmatpush1.bf16.msra.mxu0 0
      %434 = vmatprep.subr.bf16.mxu0 0
      %435 = vmatpush1.bf16.msra.mxu0 0
      %436 = vmatprep.subr.bf16.mxu0 0
      %437 = vmatpush1.bf16.msra.mxu0 0
      %438 = vmatprep.subr.bf16.mxu0 0
      %439 = vmatpush1.bf16.msra.mxu0 0
      %440 = vmatprep.subr.bf16.mxu0 0
      %441 = vmatpush1.bf16.msra.mxu0 0
      %442 = vmatprep.mubr.bf16.mxu0 0
      %443 = vmatmul.mubr.bf16.gmra.mrb[0].mxu0 %v350
      %v444 = vpop.f32.mrb[0].mxu0
      %v445 = vadd.f32 %v245, %v444
      %v446 = vpop.f32.mrb[0].mxu0
      %v447 = vpop.f32.mrb[0].mxu0
      %v448 = vadd.f32 %v245, %v447
      %v449 = vpop.f32.mrb[0].mxu0
      %450 = vmatprep.mubr.bf16.mxu0 0
      %451 = vmatmul.mubr.bf16.gmra.mrb[0].mxu0 %v353
      %v452 = vpop.f32.mrb[0].mxu0
      %v453 = vadd.f32 %v245, %v452
      %v454 = vpop.f32.mrb[0].mxu0
      %v455 = vpop.f32.mrb[0].mxu0
      %v456 = vadd.f32 %v245, %v455
      %v457 = vpop.f32.mrb[0].mxu0
      %458 = vmatprep.mubr.bf16.mxu0 0
      %459 = vmatmul.mubr.bf16.gmra.mrb[0].mxu0 %v356
      %v460 = vpop.f32.mrb[0].mxu0
      %v461 = vadd.f32 %v245, %v460
      %v462 = vpop.f32.mrb[0].mxu0
      %v463 = vpop.f32.mrb[0].mxu0
      %v464 = vadd.f32 %v245, %v463
      %v465 = vpop.f32.mrb[0].mxu0
      %466 = vmatprep.mubr.bf16.mxu0 0
      %467 = vmatmul.mubr.bf16.gmra.mrb[0].mxu0 %v359
      %v468 = vpop.f32.mrb[0].mxu0
      %v469 = vadd.f32 %v245, %v468
      %v470 = vpop.f32.mrb[0].mxu0
      %v471 = vpop.f32.mrb[0].mxu0
      %v472 = vadd.f32 %v245, %v471
      %v473 = vpop.f32.mrb[0].mxu0
      %474 = vmatprep.mubr.bf16.mxu0 0
      %475 = vmatmul.mubr.bf16.gmra.mrb[0].mxu0 %v362
      %v476 = vpop.f32.mrb[0].mxu0
      %v477 = vadd.f32 %v245, %v476
      %v478 = vpop.f32.mrb[0].mxu0
      %v479 = vpop.f32.mrb[0].mxu0
      %v480 = vadd.f32 %v245, %v479
      %v481 = vpop.f32.mrb[0].mxu0
      %482 = vmatprep.mubr.bf16.mxu0 0
      %483 = vmatmul.mubr.bf16.gmra.mrb[0].mxu0 %v365
      %v484 = vpop.f32.mrb[0].mxu0
      %v485 = vadd.f32 %v245, %v484
      %v486 = vpop.f32.mrb[0].mxu0
      %v487 = vpop.f32.mrb[0].mxu0
      %v488 = vadd.f32 %v245, %v487
      %v489 = vpop.f32.mrb[0].mxu0
      %490 = vmatprep.mubr.bf16.mxu0 0
      %491 = vmatmul.mubr.bf16.gmra.mrb[0].mxu0 %v368
      %v492 = vpop.f32.mrb[0].mxu0
      %v493 = vadd.f32 %v245, %v492
      %v494 = vpop.f32.mrb[0].mxu0
      %v495 = vpop.f32.mrb[0].mxu0
      %v496 = vadd.f32 %v245, %v495
      %v497 = vpop.f32.mrb[0].mxu0
      %498 = vmatprep.mubr.bf16.mxu0 0
      %499 = vmatmul.mubr.bf16.gmra.mrb[0].mxu0 %v371
      %v500 = vpop.f32.mrb[0].mxu0
      %v501 = vadd.f32 %v245, %v500
      %v502 = vpop.f32.mrb[0].mxu0
      %v503 = vpop.f32.mrb[0].mxu0
      %v504 = vadd.f32 %v245, %v503
      %v505 = vpop.f32.mrb[0].mxu0
      %506 = vmatprep.mubr.bf16.mxu0 0
      %507 = vmatmul.mubr.bf16.gmra.mrb[0].mxu0 %v374
      %v508 = vpop.f32.mrb[0].mxu0
      %v509 = vadd.f32 %v245, %v508
      %v510 = vpop.f32.mrb[0].mxu0
      %v511 = vpop.f32.mrb[0].mxu0
      %v512 = vadd.f32 %v245, %v511
      %v513 = vpop.f32.mrb[0].mxu0
      %514 = vmatprep.mubr.bf16.mxu0 0
      %515 = vmatmul.mubr.bf16.gmra.mrb[0].mxu0 %v377
      %v516 = vpop.f32.mrb[0].mxu0
      %v517 = vadd.f32 %v245, %v516
      %v518 = vpop.f32.mrb[0].mxu0
      %v519 = vpop.f32.mrb[0].mxu0
      %v520 = vadd.f32 %v245, %v519
      %v521 = vpop.f32.mrb[0].mxu0
      %522 = vmatprep.mubr.bf16.mxu0 0
      %523 = vmatmul.mubr.bf16.gmra.mrb[0].mxu0 %v380
      %v524 = vpop.f32.mrb[0].mxu0
      %v525 = vadd.f32 %v245, %v524
      %v526 = vpop.f32.mrb[0].mxu0
      %v527 = vpop.f32.mrb[0].mxu0
      %v528 = vadd.f32 %v245, %v527
      %v529 = vpop.f32.mrb[0].mxu0
      %530 = vmatprep.mubr.bf16.mxu0 0
      %531 = vmatmul.mubr.bf16.gmra.mrb[0].mxu0 %v383
      %v532 = vpop.f32.mrb[0].mxu0
      %v533 = vadd.f32 %v245, %v532
      %v534 = vpop.f32.mrb[0].mxu0
      %v535 = vpop.f32.mrb[0].mxu0
      %v536 = vadd.f32 %v245, %v535
      %v537 = vpop.f32.mrb[0].mxu0
      %538 = vmatprep.mubr.bf16.mxu0 0
      %539 = vmatmul.mubr.bf16.gmra.mrb[0].mxu0 %v386
      %v540 = vpop.f32.mrb[0].mxu0
      %v541 = vadd.f32 %v245, %v540
      %v542 = vpop.f32.mrb[0].mxu0
      %v543 = vpop.f32.mrb[0].mxu0
      %v544 = vadd.f32 %v245, %v543
      %v545 = vpop.f32.mrb[0].mxu0
      %546 = vmatprep.mubr.bf16.mxu0 0
      %547 = vmatmul.mubr.bf16.gmra.mrb[0].mxu0 %v389
      %v548 = vpop.f32.mrb[0].mxu0
      %v549 = vadd.f32 %v245, %v548
      %v550 = vpop.f32.mrb[0].mxu0
      %v551 = vpop.f32.mrb[0].mxu0
      %v552 = vadd.f32 %v245, %v551
      %v553 = vpop.f32.mrb[0].mxu0
      %554 = vmatprep.mubr.bf16.mxu0 0
      %555 = vmatmul.mubr.bf16.gmra.mrb[0].mxu0 %v392
      %v556 = vpop.f32.mrb[0].mxu0
      %v557 = vadd.f32 %v245, %v556
      %v558 = vpop.f32.mrb[0].mxu0
      %v559 = vpop.f32.mrb[0].mxu0
      %v560 = vadd.f32 %v245, %v559
      %v561 = vpop.f32.mrb[0].mxu0
      %562 = vmatprep.mubr.bf16.mxu0 0
      %563 = vmatmul.mubr.bf16.gmra.mrb[0].mxu0 %v395
      %v564 = vpop.f32.mrb[0].mxu0
      %v565 = vadd.f32 %v245, %v564
      %v566 = vpop.f32.mrb[0].mxu0
      %v567 = vpop.f32.mrb[0].mxu0
      %v568 = vadd.f32 %v245, %v567
      %v569 = vpop.f32.mrb[0].mxu0
      %570 = vmatprep.mubr.bf16.mxu0 0
      %571 = vmatmul.mubr.bf16.gmra.mrb[0].mxu0 %v398
      %v572 = vpop.f32.mrb[0].mxu0
      %v573 = vadd.f32 %v245, %v572
      %v574 = vpop.f32.mrb[0].mxu0
      %v575 = vpop.f32.mrb[0].mxu0
      %v576 = vadd.f32 %v245, %v575
      %v577 = vpop.f32.mrb[0].mxu0
      %578 = vmatprep.mubr.bf16.mxu0 0
      %579 = vmatmul.mubr.bf16.gmra.mrb[0].mxu0 %v401
      %v580 = vpop.f32.mrb[0].mxu0
      %v581 = vadd.f32 %v245, %v580
      %v582 = vpop.f32.mrb[0].mxu0
      %v583 = vpop.f32.mrb[0].mxu0
      %v584 = vadd.f32 %v245, %v583
      %v585 = vpop.f32.mrb[0].mxu0
      %586 = vdwg.mxu0
      %vm587 = vcmask 523264
      %588 = vst.msk [vmem:[%s192] sm:$0xff] %vm587, %v445
      %589 = vst.msk [vmem:[%s192 + $0x8] sm:$0xff] %vm587, %v448
      %590 = vst.msk [vmem:[%s192 + $0x10] sm:$0xff] %vm587, %v453
      %591 = vst.msk [vmem:[%s192 + $0x18] sm:$0xff] %vm587, %v456
      %592 = vst.msk [vmem:[%s192 + $0x20] sm:$0xff] %vm587, %v461
      %593 = vst.msk [vmem:[%s192 + $0x28] sm:$0xff] %vm587, %v464
      %594 = vst.msk [vmem:[%s192 + $0x30] sm:$0xff] %vm587, %v469
      %595 = vst.msk [vmem:[%s192 + $0x38] sm:$0xff] %vm587, %v472
      %596 = vst.msk [vmem:[%s192 + $0x40] sm:$0xff] %vm587, %v477
      %597 = vst.msk [vmem:[%s192 + $0x48] sm:$0xff] %vm587, %v480
      %598 = vst.msk [vmem:[%s192 + $0x50] sm:$0xff] %vm587, %v485
      %599 = vst.msk [vmem:[%s192 + $0x58] sm:$0xff] %vm587, %v488
      %600 = vst.msk [vmem:[%s192 + $0x60] sm:$0xff] %vm587, %v493
      %601 = vst.msk [vmem:[%s192 + $0x68] sm:$0xff] %vm587, %v496
      %602 = vst.msk [vmem:[%s192 + $0x70] sm:$0xff] %vm587, %v501
      %603 = vst.msk [vmem:[%s192 + $0x78] sm:$0xff] %vm587, %v504
      %604 = vst.msk [vmem:[%s192 + $0x80] sm:$0xff] %vm587, %v509
      %605 = vst.msk [vmem:[%s192 + $0x88] sm:$0xff] %vm587, %v512
      %606 = vst.msk [vmem:[%s192 + $0x90] sm:$0xff] %vm587, %v517
      %607 = vst.msk [vmem:[%s192 + $0x98] sm:$0xff] %vm587, %v520
      %608 = vst.msk [vmem:[%s192 + $0xa0] sm:$0xff] %vm587, %v525
      %609 = vst.msk [vmem:[%s192 + $0xa8] sm:$0xff] %vm587, %v528
      %610 = vst.msk [vmem:[%s192 + $0xb0] sm:$0xff] %vm587, %v533
      %611 = vst.msk [vmem:[%s192 + $0xb8] sm:$0xff] %vm587, %v536
      %612 = vst.msk [vmem:[%s192 + $0xc0] sm:$0xff] %vm587, %v541
      %613 = vst.msk [vmem:[%s192 + $0xc8] sm:$0xff] %vm587, %v544
      %614 = vst.msk [vmem:[%s192 + $0xd0] sm:$0xff] %vm587, %v549
      %615 = vst.msk [vmem:[%s192 + $0xd8] sm:$0xff] %vm587, %v552
      %616 = vst.msk [vmem:[%s192 + $0xe0] sm:$0xff] %vm587, %v557
      %617 = vst.msk [vmem:[%s192 + $0xe8] sm:$0xff] %vm587, %v560
      %618 = vst.msk [vmem:[%s192 + $0xf0] sm:$0xff] %vm587, %v565
      %619 = vst.msk [vmem:[%s192 + $0xf8] sm:$0xff] %vm587, %v568
      %620 = vst.msk [vmem:[%s192 + $0x100] sm:$0xff] %vm587, %v573
      %621 = vst.msk [vmem:[%s192 + $0x108] sm:$0xff] %vm587, %v576
      %622 = vst.msk [vmem:[%s192 + $0x110] sm:$0xff] %vm587, %v581
      %623 = vst.msk [vmem:[%s192 + $0x118] sm:$0xff] %vm587, %v584
      %s624 = smul.u32 36, %s19
      %p625 = scmp.lt.s32.totalorder %s18, 1
      %s626 = scalar_select %p625, %s18, 1
      %p627 = scmp.lt.s32.totalorder %s624, 35
      %s628 = scalar_select %p627, %s624, 35
      %s629 = smul.addr %s626, 36
      %s630 = sadd.s32 %s628, %s629
      %s631 = smul.addr %s630, 8
      %s632 = scalar_lea.vmem %s3, %s631
      // Predicated region
      $region33: #{tpu_custom_call.1} parent=31 // pred_check
        %p633 = pneg %p114
      $region34: #{tpu_custom_call.1} parent=31 // pred_check_branch
        %635 = sbr.rel (%p633) target = $region36
      $region35: #{tpu_custom_call.1} parent=31 // pred_region
        %s636 = smul.u32 36, %s19
      $region36: #{tpu_custom_call.1} parent=31 // pred_fallthru
        _
    $region32: #{tpu_custom_call.1} parent=5 // pred_fallthru
      _
    %p637 = scmp.le.s32.totalorder 2, %s9
    // Predicated region
    $region37: #{tpu_custom_call.1} parent=5 // pred_check
      %p638 = pneg %p637
    $region38: #{tpu_custom_call.1} parent=5 // pred_check_branch
      %640 = sbr.rel (%p638) target = $region40
    $region39: #{tpu_custom_call.1} parent=5 // pred_region
      %s641 = ssub.s32 %s9, 2
      // Predicated region
      $region41: #{tpu_custom_call.1} parent=39 // pred_check
        %p642 = pneg %p120
      $region42: #{tpu_custom_call.1} parent=39 // pred_check_branch
        %644 = sbr.rel (%p642) target = $region44
      $region43: #{tpu_custom_call.1} parent=39 // pred_region
        %s645 = smul.u32 36, %s21
        %p646 = scmp.lt.s32.totalorder %s20, 1
        %s647 = scalar_select %p646, %s20, 1
        %p648 = scmp.lt.s32.totalorder %s645, 35
        %s649 = scalar_select %p648, %s645, 35
        %s650 = smul.addr %s647, 36
        %s651 = sadd.s32 %s649, %s650
        %s652 = smul.addr %s651, 8
        %s653 = scalar_lea.vmem %s3, %s652
      $region44: #{tpu_custom_call.1} parent=39 // pred_fallthru
        _
    $region40: #{tpu_custom_call.1} parent=5 // pred_fallthru
      _
  $region6: #{tpu_custom_call.1} parent=0 // loop_footer
    %s13 = sadd.s32 1, %s9
  $region7: #{tpu_custom_call.1} parent=0 // loop_footer_branch
    %8 = sbr.rel target = $region3
  $region8: #{tpu_custom_call.1} parent=0 // loop_exit
    _

</llo_original>
